<compile_context>
chip_gen: v7x
topology: tpu7x:2x2x1
jax: 0.10.0
libtpu: 0.0.40
codegen_flags: <defaults>
</compile_context>

<pallas_src>
import jax
import jax.numpy as jnp
from jax.experimental import pallas as pl
from jax.experimental.pallas import tpu as pltpu
from jax.scipy.special import erf as _erf

_LANES = 128
_MAX_ROW_TILE = 8192     # 8192 * 128 * 4 B = 4 MiB per f32 buffer
_SMALL_ROWS = 512        # below this, a single block; pipelining not worth it
_MIN_GRID_STEPS = 8      # enough blocks for DMA/compute overlap + 2-TC (v7x)
_VMEM_LIMIT = 32 * 1024 * 1024  # explicit scoped-VMEM limit (safe on v5e..v7x)

# Abramowitz & Stegun 7.1.26 coefficients (erf on z >= 0, max abs err 1.5e-7).
_P = 0.3275911
_A1 = 0.254829592
_A2 = -0.284496736
_A3 = 1.421413741
_A4 = -1.453152027
_A5 = 1.061405429


def _erf_nonneg(z):
    """erf(z) for z >= 0 via A&S 7.1.26 (one exp + one divide + short poly)."""
    # TODO(synk): on v7x the EUP is the binding unit; pl.reciprocal(approx=True)
    # here would cut one full-precision divide but adds ~1e-4 erf error.
    t = 1.0 / (1.0 + _P * z)
    poly = t * (_A1 + t * (_A2 + t * (_A3 + t * (_A4 + t * _A5))))
    return 1.0 - poly * jnp.exp(-(z * z))


def _serf_kernel(x_ref, o_ref):
    xf = x_ref[...].astype(jnp.float32)
    # numerically stable softplus: max(x, 0) + log(1 + exp(-|x|))   (always >= 0)
    sp = jnp.maximum(xf, 0.0) + jnp.log(1.0 + jnp.exp(-jnp.abs(xf)))
    o_ref[...] = (xf * _erf_nonneg(sp)).astype(o_ref.dtype)


def _sublane_multiple(dtype) -> int:
    itemsize = jnp.dtype(dtype).itemsize
    return max(8, 32 // max(itemsize, 1))  # 8 (f32), 16 (bf16/f16), 32 (int8/fp8)


def serf(x: jax.Array) -> jax.Array:
    orig_shape = x.shape
    orig_dtype = x.dtype
    n = x.size
    itemsize = jnp.dtype(orig_dtype).itemsize
    sub = _sublane_multiple(orig_dtype)

    flat = x.reshape(-1)

    # Lane alignment: only pad when n is not a multiple of 128, and only by
    # < 128 elements.  Lane-aligned tensors (the common case) are zero-copy.
    n_pad = pl.cdiv(n, _LANES) * _LANES
    if n_pad != n:
        # TODO(synk): this pad + tail slice each cost one extra HBM pass on the
        # whole tensor; a masked final block (pltpu.store + scalar n) would
        # remove them for lane-unaligned sizes.
        flat = jnp.pad(flat, (0, n_pad - n))

    rows = n_pad // _LANES

    # Row-tile selection:
    #  - tiny inputs: one full-array block (always a legal block shape).
    #  - otherwise: at least _MIN_GRID_STEPS blocks (pipelining + megacore),
    #    rounded up to the dtype sublane multiple, capped at _MAX_ROW_TILE so
    #    double-buffered in+out stays well under the scoped-VMEM limit.
    if rows <= _SMALL_ROWS:
        row_tile = rows
    else:
        target = pl.cdiv(rows, _MIN_GRID_STEPS)
        target = ((target + sub - 1) // sub) * sub
        row_tile = min(_MAX_ROW_TILE, max(sub, target))
    grid = (pl.cdiv(rows, row_tile),)  # ragged last block is masked by Pallas

    x2d = flat.reshape(rows, _LANES)

    out2d = pl.pallas_call(
        _serf_kernel,
        out_shape=jax.ShapeDtypeStruct((rows, _LANES), orig_dtype),
        grid_spec=pltpu.PrefetchScalarGridSpec(
            num_scalar_prefetch=0,
            grid=grid,
            in_specs=[pl.BlockSpec((row_tile, _LANES), lambda i: (i, 0))],
            out_specs=pl.BlockSpec((row_tile, _LANES), lambda i: (i, 0)),
        ),
        compiler_params=pltpu.CompilerParams(
            dimension_semantics=("parallel",),
            vmem_limit_bytes=_VMEM_LIMIT,
        ),
        cost_estimate=pl.CostEstimate(
            flops=20 * n_pad,
            transcendentals=4 * n_pad,  # 2 exp + 1 log + 1 divide per element
            bytes_accessed=2 * n_pad * itemsize,
        ),
    )(x2d)

    out = out2d.reshape(-1)
    if n_pad != n:
        out = out[:n]
    return out.reshape(orig_shape)


def serf_ref(x: jax.Array) -> jax.Array:
    xf = x.astype(jnp.float32)
    return (xf * _erf(jax.nn.softplus(xf))).astype(x.dtype)


if __name__ == "__main__":
    key = jax.random.PRNGKey(0)
    x = jax.random.normal(key, (2, 4, 16, 16), dtype=jnp.float32)  # NCHW-like

    y = serf(x)
    jax.block_until_ready(y)

    y_ref = serf_ref(x)
    assert y.shape == x.shape and y.dtype == x.dtype
    err = float(jnp.max(jnp.abs(y.astype(jnp.float32) - y_ref.astype(jnp.float32))))
    assert jnp.allclose(y, y_ref, atol=1e-5, rtol=1e-5), err

    print("KERNEL_OK")
</pallas_src>

<mosaic_0001>
module attributes {stable_mosaic.version = 11 : i64} {
  func.func @_serf_kernel(%arg0: i32, %arg1: memref<16x128xf32, #tpu.memory_space<vmem>>, %arg2: memref<16x128xf32, #tpu.memory_space<vmem>>) attributes {dimension_semantics = [#tpu.dimension_semantics<parallel>], iteration_bounds = array<i64: 1>, scalar_prefetch = 0 : i64, scratch_operands = 0 : i64, tpu.core_type = #tpu.core_type<tc>, window_params = [{transform_indices = @transform_0, window_bounds = array<i64: 16, 128>}, {transform_indices = @transform_1, window_bounds = array<i64: 16, 128>}]} {
    %c0 = arith.constant 0 : index
    %c0_0 = arith.constant 0 : index
    %0 = vector.load %arg1[%c0, %c0_0] : memref<16x128xf32, #tpu.memory_space<vmem>>, vector<16x128xf32>
    %cst = arith.constant 0.000000e+00 : f32
    %1 = vector.broadcast %cst : f32 to vector<16x128xf32>
    %2 = arith.maximumf %0, %1 : vector<16x128xf32>
    %3 = math.absf %0 : vector<16x128xf32>
    %cst_1 = arith.constant 0.000000e+00 : f32
    %4 = vector.broadcast %cst_1 : f32 to vector<16x128xf32>
    %5 = arith.subf %4, %3 : vector<16x128xf32>
    %6 = math.exp %5 : vector<16x128xf32>
    %cst_2 = arith.constant 1.000000e+00 : f32
    %7 = vector.broadcast %cst_2 : f32 to vector<16x128xf32>
    %8 = arith.addf %7, %6 : vector<16x128xf32>
    %9 = math.log %8 : vector<16x128xf32>
    %10 = arith.addf %2, %9 : vector<16x128xf32>
    %cst_3 = arith.constant 0.327591091 : f32
    %11 = vector.broadcast %cst_3 : f32 to vector<16x128xf32>
    %12 = arith.mulf %11, %10 : vector<16x128xf32>
    %cst_4 = arith.constant 1.000000e+00 : f32
    %13 = vector.broadcast %cst_4 : f32 to vector<16x128xf32>
    %14 = arith.addf %13, %12 : vector<16x128xf32>
    %cst_5 = arith.constant 1.000000e+00 : f32
    %15 = vector.broadcast %cst_5 : f32 to vector<16x128xf32>
    %16 = arith.divf %15, %14 : vector<16x128xf32>
    %cst_6 = arith.constant 1.06140542 : f32
    %17 = vector.broadcast %cst_6 : f32 to vector<16x128xf32>
    %18 = arith.mulf %16, %17 : vector<16x128xf32>
    %cst_7 = arith.constant -1.45315206 : f32
    %19 = vector.broadcast %cst_7 : f32 to vector<16x128xf32>
    %20 = arith.addf %19, %18 : vector<16x128xf32>
    %21 = arith.mulf %16, %20 : vector<16x128xf32>
    %cst_8 = arith.constant 1.42141378 : f32
    %22 = vector.broadcast %cst_8 : f32 to vector<16x128xf32>
    %23 = arith.addf %22, %21 : vector<16x128xf32>
    %24 = arith.mulf %16, %23 : vector<16x128xf32>
    %cst_9 = arith.constant -0.284496725 : f32
    %25 = vector.broadcast %cst_9 : f32 to vector<16x128xf32>
    %26 = arith.addf %25, %24 : vector<16x128xf32>
    %27 = arith.mulf %16, %26 : vector<16x128xf32>
    %cst_10 = arith.constant 0.254829586 : f32
    %28 = vector.broadcast %cst_10 : f32 to vector<16x128xf32>
    %29 = arith.addf %28, %27 : vector<16x128xf32>
    %30 = arith.mulf %16, %29 : vector<16x128xf32>
    %31 = arith.mulf %10, %10 : vector<16x128xf32>
    %cst_11 = arith.constant 0.000000e+00 : f32
    %32 = vector.broadcast %cst_11 : f32 to vector<16x128xf32>
    %33 = arith.subf %32, %31 : vector<16x128xf32>
    %34 = math.exp %33 : vector<16x128xf32>
    %35 = arith.mulf %30, %34 : vector<16x128xf32>
    %cst_12 = arith.constant 1.000000e+00 : f32
    %36 = vector.broadcast %cst_12 : f32 to vector<16x128xf32>
    %37 = arith.subf %36, %35 : vector<16x128xf32>
    %38 = arith.mulf %0, %37 : vector<16x128xf32>
    %c0_13 = arith.constant 0 : index
    %c0_14 = arith.constant 0 : index
    %39 = vector.load %arg2[%c0_13, %c0_14] : memref<16x128xf32, #tpu.memory_space<vmem>>, vector<16x128xf32>
    tpu.vector_store %arg2[%c0_13, %c0_14], %38 {strides = array<i32>} : memref<16x128xf32, #tpu.memory_space<vmem>>, vector<16x128xf32>,
    return
  }
  func.func @transform_0(%arg0: i32) -> (i32, i32) {
    %c0_i32 = arith.constant 0 : i32
    %c0_i32_0 = arith.constant 0 : i32
    return %arg0, %c0_i32 : i32, i32
  }
  func.func @transform_1(%arg0: i32) -> (i32, i32) {
    %c0_i32 = arith.constant 0 : i32
    %c0_i32_0 = arith.constant 0 : i32
    return %arg0, %c0_i32 : i32, i32
  }
}

</mosaic_0001>

<llo_original>
// kernel: tpu_custom_call.1
$region0: #{tpu_custom_call.1}
  #allocation0 [shape = 'u32[]', space=smem, size = 0x4, offset = 0x4, fixed_abs, tag = 'smem constant byte address 0x4 - core index']
  #allocation1 [shape = 'u32[144,128]{1,0:T(1,128)}', space=vmem, size = 0x12000, scoped, tag = 'internal scratch']
  %s0 = inlined_call_operand.hbm [shape: f32[16,128], index: 0, kind: input, shape index: {}]
  %s1 = inlined_call_operand.hbm [shape: f32[16,128], index: 1, kind: output, shape index: {}]
  %s2 = sld [smem:[#allocation0]]
  $region18: #{tpu_custom_call.1} parent=0
    _
  %s4 = ssub.s32 1, %s2
  %s5 = scalar_select 0, %s4, %s2
  $region1: #{tpu_custom_call.1} parent=0
    #allocation2 [shape = 'u8[8192]{0}', space=vmem, size = 0x2000, scoped, tag = 'input window, operand 0, single buffered']
    #allocation3 [shape = 's32[1]{0}', space=sflag, size = 0x4, scoped, tag = 'scoped memory for tpu_custom_call.1']
    #allocation4 [shape = 's32[1]{0}', space=sflag, size = 0x4, scoped, tag = 'scoped memory for tpu_custom_call.1']
    #allocation5 [shape = 'u8[8192]{0}', space=vmem, size = 0x2000, scoped, tag = 'output window, operand 0, single buffered']
    %6 = vsyncpa [#allocation3], 0
    %7 = vsyncpa [#allocation4], 0
    // Predicated region
    $region2: #{tpu_custom_call.1} parent=1 // pred_check
      _
    $region3: #{tpu_custom_call.1} parent=1 // pred_check_branch
      %9 = sbr.rel (0) target = $region5
    $region4: #{tpu_custom_call.1} parent=1 // pred_region
      %s11 = ssub.s32 256, 256
      %12 = vsyncadd [#allocation3], %s11
      %s13 = sshll.u32 [#allocation2], 4
      %s14 = int_to_ptr.vmem [resolvable:$true] %s13
      %19 = dma.hbm_to_vmem [thread:$0]  %s0, 256, %s14, [#allocation3], 128, 128, 8
    $region5: #{tpu_custom_call.1} parent=1 // pred_fallthru
      _
    // Predicated region
    $region6: #{tpu_custom_call.1} parent=1 // pred_check
      _
    $region7: #{tpu_custom_call.1} parent=1 // pred_check_branch
      %21 = sbr.rel (0) target = $region9
    $region8: #{tpu_custom_call.1} parent=1 // pred_region
      %22 = dma.done [#allocation3], 256
    $region9: #{tpu_custom_call.1} parent=1 // pred_fallthru
      _
    %v23 = vld [vmem:[#allocation2] sm:$0xff]
    %v24 = vld [vmem:[#allocation2 + $0x8] sm:$0xff]
    %v25 = vmax.f32 %v23, 0.0
    %v26 = vmax.f32 %v24, 0.0
    %v27 = vand.u32 2147483647, %v23
    %v28 = vand.u32 2147483647, %v24
    %v29 = vsub.f32 0.0, %v27
    %v30 = vsub.f32 0.0, %v28
    %v31 = vmul.f32 %v29, 1.442695
    %v32 = vpow.pop %v31
    %v33 = vmul.f32 %v30, 1.442695
    %v34 = vpow.pop %v33
    %v35 = vadd.f32 %v32, 1.0
    %v36 = vadd.f32 %v34, 1.0
    %v37 = vlog2.pop %v35
    %v38 = vmul.f32 %v37, 0.6931472
    %v39 = vlog2.pop %v36
    %v40 = vmul.f32 %v39, 0.6931472
    %v41 = vadd.f32 %v25, %v38
    %v42 = vadd.f32 %v26, %v40
    %v43 = vmul.f32 %v41, 0.3275911
    %v44 = vmul.f32 %v42, 0.3275911
    %v45 = vadd.f32 %v43, 1.0
    %v46 = vadd.f32 %v44, 1.0
    %v47 = vrcp.pop %v45
    %v48 = vmul.f32 1.0, %v47
    %v49 = vrcp.pop %v46
    %v50 = vmul.f32 1.0, %v49
    %v51 = vmul.f32 %v48, 1.0614054
    %v52 = vmul.f32 %v50, 1.0614054
    %v53 = vadd.f32 %v51, -1.4531521
    %v54 = vadd.f32 %v52, -1.4531521
    %v55 = vmul.f32 %v48, %v53
    %v56 = vmul.f32 %v50, %v54
    %v57 = vadd.f32 %v55, 1.4214138
    %v58 = vadd.f32 %v56, 1.4214138
    %v59 = vmul.f32 %v48, %v57
    %v60 = vmul.f32 %v50, %v58
    %v61 = vadd.f32 %v59, -0.28449672
    %v62 = vadd.f32 %v60, -0.28449672
    %v63 = vmul.f32 %v48, %v61
    %v64 = vmul.f32 %v50, %v62
    %v65 = vadd.f32 %v63, 0.2548296
    %v66 = vadd.f32 %v64, 0.2548296
    %v67 = vmul.f32 %v48, %v65
    %v68 = vmul.f32 %v50, %v66
    %v69 = vmul.f32 %v41, %v41
    %v70 = vmul.f32 %v42, %v42
    %v71 = vsub.f32 0.0, %v69
    %v72 = vsub.f32 0.0, %v70
    %v73 = vmul.f32 %v71, 1.442695
    %v74 = vpow.pop %v73
    %v75 = vmul.f32 %v72, 1.442695
    %v76 = vpow.pop %v75
    %v77 = vmul.f32 %v67, %v74
    %v78 = vmul.f32 %v68, %v76
    %v79 = vsub.f32 1.0, %v77
    %v80 = vsub.f32 1.0, %v78
    %v81 = vmul.f32 %v23, %v79
    %v82 = vmul.f32 %v24, %v80
    %83 = vst [vmem:[#allocation5] sm:$0xff] %v81
    %84 = vst [vmem:[#allocation5 + $0x8] sm:$0xff] %v82
    // Predicated region
    $region10: #{tpu_custom_call.1} parent=1 // pred_check
      _
    $region11: #{tpu_custom_call.1} parent=1 // pred_check_branch
      %86 = sbr.rel (0) target = $region13
    $region12: #{tpu_custom_call.1} parent=1 // pred_region
      %s88 = ssub.s32 256, 256
      %89 = vsyncadd [#allocation4], %s88
      %s90 = sshll.u32 [#allocation5], 4
      %s91 = int_to_ptr.vmem [resolvable:$true] %s90
      %96 = dma.vmem_to_hbm [thread:$0]  %s91, 256, %s1, [#allocation4], 128, 128, 8
    $region13: #{tpu_custom_call.1} parent=1 // pred_fallthru
      _
    // Predicated region
    $region14: #{tpu_custom_call.1} parent=1 // pred_check
      _
    $region15: #{tpu_custom_call.1} parent=1 // pred_check_branch
      %98 = sbr.rel (0) target = $region17
    $region16: #{tpu_custom_call.1} parent=1 // pred_region
      %99 = dma.done [#allocation4], 256
    $region17: #{tpu_custom_call.1} parent=1 // pred_fallthru
      _
    %100 = vsyncpa [#allocation3], 1
    %101 = vsyncpa [#allocation4], 1

</llo_original>
